<compile_context>
chip_gen: v6e
topology: v6e:2x2x1
jax: 0.10.0
libtpu: 0.0.40
codegen_flags: <defaults>
</compile_context>

<pallas_src>
import jax
import jax.numpy as jnp
from jax.experimental import pallas as pl
from jax.experimental.pallas import tpu as pltpu

_NEG_SLOPE = 0.01  # torch.nn.LeakyReLU default negative_slope


def _leaky_relu(x):
    return jnp.where(x >= 0.0, x, _NEG_SLOPE * x)


# ----------------------------- kernels --------------------------------------

def _ffn_resident_kernel(x_ref, w1_ref, b1_ref, w2_ref, b2_ref, o_ref):
    """Both weight matrices resident in VMEM; 1-D grid over row tiles only."""
    x = x_ref[...].astype(jnp.bfloat16)
    h = jnp.dot(x, w1_ref[...], preferred_element_type=jnp.float32)
    h = _leaky_relu(h + b1_ref[...])
    # TODO(synk): nn.Dropout is identity in eval mode; training-mode stochastic
    # dropout would need pltpu.prng_seed + pltpu.stateful_bernoulli per grid step.
    y = jnp.dot(h.astype(jnp.bfloat16), w2_ref[...],
                preferred_element_type=jnp.float32)
    o_ref[...] = (y + b2_ref[...]).astype(o_ref.dtype)


def _ffn_streamed_kernel(x_ref, w1_ref, b1_ref, w2_ref, b2_ref, o_ref, acc_ref):
    """F too large for resident weights: stream ff tiles into an f32 accumulator."""
    @pl.when(pl.program_id(1) == 0)
    def _():
        acc_ref[...] = jnp.zeros_like(acc_ref)

    x = x_ref[...].astype(jnp.bfloat16)
    h = jnp.dot(x, w1_ref[...], preferred_element_type=jnp.float32)
    h = _leaky_relu(h + b1_ref[...])
    acc_ref[...] += jnp.dot(h.astype(jnp.bfloat16), w2_ref[...],
                            preferred_element_type=jnp.float32)

    @pl.when(pl.program_id(1) == pl.num_programs(1) - 1)
    def _():
        o_ref[...] = (acc_ref[...] + b2_ref[...]).astype(o_ref.dtype)


# ----------------------------- tiling helpers --------------------------------

def _round_up(x, m):
    return (x + m - 1) // m * m


def _round_down(x, m):
    return (x // m) * m


def _vmem_budget_bytes():
    """~70% of this generation's VMEM (v5e/v6e: 128 MiB, v7x: 64 MiB per TC)."""
    try:
        cap = pltpu.get_tpu_info().vmem_capacity_bytes
    except Exception:
        cap = 64 * 1024 * 1024  # assume the smallest (v7x) if the query fails
    return int(cap * 0.7)


def _pick_tile_r(N, max_rows):
    """Row tile: full extent for small N (always a legal block shape); otherwise
    a 256-aligned tile leaving >= 2 row tiles so both v7x TensorCores get work."""
    if N <= 512 and N <= max_rows:
        return N
    half = _round_up((N + 1) // 2, 256)
    tile = min(max_rows, half, _round_up(N, 256))
    return max(256, _round_down(tile, 256))


def _pick_tile_f(H, F, tile_r, x_item, out_item, budget):
    """Largest 128-multiple ff tile that divides F and fits the VMEM budget
    (weights triple-buffered via Buffered(3) in the streamed path)."""
    fixed = (2 * tile_r * H * (x_item + out_item)  # double-buffered x / out tiles
             + tile_r * H * 4                      # f32 accumulator
             + 2 * (F + H) * 4)                    # biases (f32, double-buffered)
    per_tf = 12 * H + 6 * tile_r   # 3 bufs * (W1+W2 slab, bf16) + f32+bf16 intermediate
    cap = (budget - fixed) // per_tf
    cap = min(F, max(128, _round_down(cap, 128)))
    t = cap
    while t >= 128:
        if F % t == 0:
            return t
        t -= 128
    # No 128-multiple divisor of F: fall back to the full extent (resident path).
    return F


# ----------------------------- wrapper ---------------------------------------

def chbert_feed_forward(hidden_states, params, *, max_tile_rows_resident=512,
                        max_tile_rows_streamed=768):
    """CHBertFeedForward forward: hidden_states [..., H] -> [..., H]."""
    orig_shape = hidden_states.shape
    H = orig_shape[-1]
    x = hidden_states.reshape(-1, H)
    N = x.shape[0]

    w1, b1 = params["w1"], params["b1"]
    w2, b2 = params["w2"], params["b2"]
    F = w1.shape[1]
    assert w1.shape == (H, F) and w2.shape == (F, H)

    # MXU operands in bf16 (store weights as bf16 outside the hot path in a real
    # model so these casts are no-ops); biases and accumulation stay f32.
    w1_bf = w1.astype(jnp.bfloat16)
    w2_bf = w2.astype(jnp.bfloat16)
    b1_f = b1.reshape(1, F).astype(jnp.float32)
    b2_f = b2.reshape(1, H).astype(jnp.float32)

    out_dtype = hidden_states.dtype
    x_item = jnp.dtype(x.dtype).itemsize
    out_item = jnp.dtype(out_dtype).itemsize
    budget = _vmem_budget_bytes()
    w_bytes = 4 * H * F  # bf16 W1 + W2

    # Resident-weights path whenever the (double-buffered) weights plus per-step
    # working set fit VMEM -> W1/W2 are DMA'd from HBM exactly once per call.
    tile_r = _pick_tile_r(N, max_tile_rows_resident)
    resident_need = (2 * w_bytes
                     + 2 * tile_r * H * (x_item + out_item)
                     + tile_r * F * 6          # f32 intermediate + its bf16 cast
                     + 2 * (F + H) * 4)
    resident = resident_need <= budget

    if not resident:
        tile_r = _pick_tile_r(N, max_tile_rows_streamed)
        tile_f = _pick_tile_f(H, F, tile_r, x_item, out_item, budget)
        if tile_f == F:  # pathological F with no 128-multiple divisor
            resident = True

    n_row_tiles = -(-N // tile_r)
    flops = 4 * N * H * F  # two GEMMs

    if resident:
        bytes_accessed = int(N * H * (x_item + out_item) + w_bytes + 4 * (F + H))
        out = pl.pallas_call(
            _ffn_resident_kernel,
            out_shape=jax.ShapeDtypeStruct((N, H), out_dtype),
            grid_spec=pltpu.PrefetchScalarGridSpec(
                num_scalar_prefetch=0,
                grid=(n_row_tiles,),
                in_specs=[
                    pl.BlockSpec((tile_r, H), lambda i: (i, 0)),  # x row tile
                    pl.BlockSpec((H, F), lambda i: (0, 0)),       # W1 (resident)
                    pl.BlockSpec((1, F), lambda i: (0, 0)),       # b1
                    pl.BlockSpec((F, H), lambda i: (0, 0)),       # W2 (resident)
                    pl.BlockSpec((1, H), lambda i: (0, 0)),       # b2
                ],
                out_specs=pl.BlockSpec((tile_r, H), lambda i: (i, 0)),
            ),
            compiler_params=pltpu.CompilerParams(
                dimension_semantics=("parallel",),
                vmem_limit_bytes=budget,
            ),
            cost_estimate=pl.CostEstimate(
                flops=flops, transcendentals=0, bytes_accessed=bytes_accessed),
        )(x, w1_bf, b1_f, w2_bf, b2_f)
    else:
        # Weights are re-streamed once per row tile -> truthful byte count.
        bytes_accessed = int(N * H * (x_item + out_item)
                             + n_row_tiles * (w_bytes + 4 * F) + 4 * H)
        out = pl.pallas_call(
            _ffn_streamed_kernel,
            out_shape=jax.ShapeDtypeStruct((N, H), out_dtype),
            grid_spec=pltpu.PrefetchScalarGridSpec(
                num_scalar_prefetch=0,
                grid=(n_row_tiles, F // tile_f),
                in_specs=[
                    pl.BlockSpec((tile_r, H), lambda i, j: (i, 0)),   # x row tile
                    pl.BlockSpec((H, tile_f), lambda i, j: (0, j),    # W1 ff-tile
                                 pipeline_mode=pl.Buffered(3)),
                    pl.BlockSpec((1, tile_f), lambda i, j: (0, j)),   # b1 ff-tile
                    pl.BlockSpec((tile_f, H), lambda i, j: (j, 0),    # W2 ff-tile
                                 pipeline_mode=pl.Buffered(3)),
                    pl.BlockSpec((1, H), lambda i, j: (0, 0)),        # b2
                ],
                out_specs=pl.BlockSpec((tile_r, H), lambda i, j: (i, 0)),
                scratch_shapes=[pltpu.VMEM((tile_r, H), jnp.float32)],
            ),
            compiler_params=pltpu.CompilerParams(
                dimension_semantics=("parallel", "arbitrary"),
                vmem_limit_bytes=budget,
            ),
            cost_estimate=pl.CostEstimate(
                flops=flops, transcendentals=0, bytes_accessed=bytes_accessed),
        )(x, w1_bf, b1_f, w2_bf, b2_f)

    return out.reshape(orig_shape)


# ----------------------------- main ------------------------------------------

if __name__ == "__main__":
    # Small config consistent with the module's forward.
    B, S, H, FF_MULT = 2, 8, 32, 4
    F = H * FF_MULT

    key = jax.random.PRNGKey(0)
    ks = jax.random.split(key, 5)

    # Deterministic synthetic parameters (weights stored [in, out]).
    params = {
        "w1": jax.random.normal(ks[0], (H, F), jnp.float32) * 0.02,
        "b1": jax.random.normal(ks[1], (F,), jnp.float32) * 0.02,
        "w2": jax.random.normal(ks[2], (F, H), jnp.float32) * 0.02,
        "b2": jax.random.normal(ks[3], (H,), jnp.float32) * 0.02,
    }
    hidden_states = jax.random.normal(ks[4], (B, S, H), jnp.float32)

    out = chbert_feed_forward(hidden_states, params)
    jax.block_until_ready(out)
    assert out.shape == (B, S, H)

    # Reference with the same bf16-operand / f32-accumulate numerics.
    def ref(x, p):
        xf = x.reshape(-1, H)
        h = jnp.dot(xf.astype(jnp.bfloat16), p["w1"].astype(jnp.bfloat16),
                    preferred_element_type=jnp.float32) + p["b1"].reshape(1, -1)
        h = jnp.where(h >= 0.0, h, _NEG_SLOPE * h)
        y = jnp.dot(h.astype(jnp.bfloat16), p["w2"].astype(jnp.bfloat16),
                    preferred_element_type=jnp.float32) + p["b2"].reshape(1, -1)
        return y.astype(x.dtype).reshape(x.shape)

    out_ref = ref(hidden_states, params)
    assert jnp.allclose(out, out_ref, atol=1e-4, rtol=1e-4)

    print("KERNEL_OK")
</pallas_src>

<mosaic_0001>
module attributes {stable_mosaic.version = 11 : i64} {
  func.func @_ffn_resident_kernel(%arg0: i32, %arg1: memref<16x32xf32, #tpu.memory_space<vmem>>, %arg2: memref<32x128xbf16, #tpu.memory_space<vmem>>, %arg3: memref<1x128xf32, #tpu.memory_space<vmem>>, %arg4: memref<128x32xbf16, #tpu.memory_space<vmem>>, %arg5: memref<1x32xf32, #tpu.memory_space<vmem>>, %arg6: memref<16x32xf32, #tpu.memory_space<vmem>>) attributes {dimension_semantics = [#tpu.dimension_semantics<parallel>], iteration_bounds = array<i64: 1>, scalar_prefetch = 0 : i64, scratch_operands = 0 : i64, tpu.core_type = #tpu.core_type<tc>, window_params = [{transform_indices = @transform_0, window_bounds = array<i64: 16, 32>}, {pipeline_mode = #tpu.pipeline_mode<synchronous>, transform_indices = @transform_1, window_bounds = array<i64: 32, 128>}, {pipeline_mode = #tpu.pipeline_mode<synchronous>, transform_indices = @transform_2, window_bounds = array<i64: 1, 128>}, {pipeline_mode = #tpu.pipeline_mode<synchronous>, transform_indices = @transform_3, window_bounds = array<i64: 128, 32>}, {pipeline_mode = #tpu.pipeline_mode<synchronous>, transform_indices = @transform_4, window_bounds = array<i64: 1, 32>}, {transform_indices = @transform_5, window_bounds = array<i64: 16, 32>}]} {
    %c0 = arith.constant 0 : index
    %c0_0 = arith.constant 0 : index
    %0 = vector.load %arg1[%c0, %c0_0] : memref<16x32xf32, #tpu.memory_space<vmem>>, vector<16x32xf32>
    %1 = arith.truncf %0 : vector<16x32xf32> to vector<16x32xbf16>
    %c0_1 = arith.constant 0 : index
    %c0_2 = arith.constant 0 : index
    %2 = vector.load %arg2[%c0_1, %c0_2] : memref<32x128xbf16, #tpu.memory_space<vmem>>, vector<32x128xbf16>
    %cst = arith.constant dense<0.000000e+00> : vector<16x128xf32>
    %3 = tpu.matmul %1, %2, %cst {dimension_numbers = #tpu.dot_dimension_numbers<[1], [0], [0], [1], [0, 0, 1, 1], [], []>} : vector<16x32xbf16>, vector<32x128xbf16>, vector<16x128xf32> -> vector<16x128xf32>
    %c0_3 = arith.constant 0 : index
    %c0_4 = arith.constant 0 : index
    %4 = vector.load %arg3[%c0_3, %c0_4] : memref<1x128xf32, #tpu.memory_space<vmem>>, vector<1x128xf32>
    %5 = vector.broadcast %4 : vector<1x128xf32> to vector<16x128xf32>
    %6 = arith.addf %3, %5 : vector<16x128xf32>
    %cst_5 = arith.constant 0.000000e+00 : f32
    %7 = vector.broadcast %cst_5 : f32 to vector<16x128xf32>
    %8 = arith.cmpf oge, %6, %7 : vector<16x128xf32>
    %cst_6 = arith.constant 0.00999999977 : f32
    %9 = vector.broadcast %cst_6 : f32 to vector<16x128xf32>
    %10 = arith.mulf %9, %6 : vector<16x128xf32>
    %11 = arith.select %8, %6, %10 : vector<16x128xi1>, vector<16x128xf32>
    %12 = arith.truncf %11 : vector<16x128xf32> to vector<16x128xbf16>
    %c0_7 = arith.constant 0 : index
    %c0_8 = arith.constant 0 : index
    %13 = vector.load %arg4[%c0_7, %c0_8] : memref<128x32xbf16, #tpu.memory_space<vmem>>, vector<128x32xbf16>
    %cst_9 = arith.constant dense<0.000000e+00> : vector<16x32xf32>
    %14 = tpu.matmul %12, %13, %cst_9 {dimension_numbers = #tpu.dot_dimension_numbers<[1], [0], [0], [1], [0, 0, 1, 1], [], []>} : vector<16x128xbf16>, vector<128x32xbf16>, vector<16x32xf32> -> vector<16x32xf32>
    %c0_10 = arith.constant 0 : index
    %c0_11 = arith.constant 0 : index
    %15 = vector.load %arg5[%c0_10, %c0_11] : memref<1x32xf32, #tpu.memory_space<vmem>>, vector<1x32xf32>
    %16 = vector.broadcast %15 : vector<1x32xf32> to vector<16x32xf32>
    %17 = arith.addf %14, %16 : vector<16x32xf32>
    %c0_12 = arith.constant 0 : index
    %c0_13 = arith.constant 0 : index
    %18 = vector.load %arg6[%c0_12, %c0_13] : memref<16x32xf32, #tpu.memory_space<vmem>>, vector<16x32xf32>
    tpu.vector_store %arg6[%c0_12, %c0_13], %17 {strides = array<i32>} : memref<16x32xf32, #tpu.memory_space<vmem>>, vector<16x32xf32>,
    return
  }
  func.func @transform_0(%arg0: i32) -> (i32, i32) {
    %c0_i32 = arith.constant 0 : i32
    %c0_i32_0 = arith.constant 0 : i32
    return %arg0, %c0_i32 : i32, i32
  }
  func.func @transform_1(%arg0: i32) -> (i32, i32) {
    %c0_i32 = arith.constant 0 : i32
    %c0_i32_0 = arith.constant 0 : i32
    %c0_i32_1 = arith.constant 0 : i32
    return %c0_i32, %c0_i32_0 : i32, i32
  }
  func.func @transform_2(%arg0: i32) -> (i32, i32) {
    %c0_i32 = arith.constant 0 : i32
    %c0_i32_0 = arith.constant 0 : i32
    %c0_i32_1 = arith.constant 0 : i32
    return %c0_i32, %c0_i32_0 : i32, i32
  }
  func.func @transform_3(%arg0: i32) -> (i32, i32) {
    %c0_i32 = arith.constant 0 : i32
    %c0_i32_0 = arith.constant 0 : i32
    %c0_i32_1 = arith.constant 0 : i32
    return %c0_i32, %c0_i32_0 : i32, i32
  }
  func.func @transform_4(%arg0: i32) -> (i32, i32) {
    %c0_i32 = arith.constant 0 : i32
    %c0_i32_0 = arith.constant 0 : i32
    %c0_i32_1 = arith.constant 0 : i32
    return %c0_i32, %c0_i32_0 : i32, i32
  }
  func.func @transform_5(%arg0: i32) -> (i32, i32) {
    %c0_i32 = arith.constant 0 : i32
    %c0_i32_0 = arith.constant 0 : i32
    return %arg0, %c0_i32 : i32, i32
  }
}

</mosaic_0001>

<llo_original>
// kernel: tpu_custom_call.1
$region0: #{tpu_custom_call.1}
  #allocation0 [shape = 'u32[]', space=smem, size = 0x4, offset = 0x4, fixed_abs, tag = 'smem constant byte address 0x4 - core index']
  #allocation1 [shape = 'u32[144,128]{1,0:T(1,128)}', space=vmem, size = 0x12000, scoped, tag = 'internal scratch']
  %s0 = inlined_call_operand.vmem [shape: f32[16,32], index: 0, kind: input, shape index: {}]
  %s1 = inlined_call_operand.vmem [shape: bf16[32,128], index: 1, kind: input, shape index: {}]
  %s2 = inlined_call_operand.vmem [shape: f32[1,128], index: 2, kind: input, shape index: {}]
  %s3 = inlined_call_operand.vmem [shape: bf16[128,32], index: 3, kind: input, shape index: {}]
  %s4 = inlined_call_operand.vmem [shape: f32[1,32], index: 4, kind: input, shape index: {}]
  %s5 = inlined_call_operand.hbm [shape: f32[16,32], index: 5, kind: output, shape index: {}]
  %s6 = sld [smem:[#allocation0]]
  $region30: #{tpu_custom_call.1} parent=0
    _
  %s8 = ssub.s32 1, %s6
  %s9 = scalar_select 0, %s8, %s6
  $region1: #{tpu_custom_call.1} parent=0
    #allocation2 [shape = 'u8[8192]{0}', space=vmem, size = 0x2000, scoped, tag = 'output window, operand 0, single buffered']
    #allocation3 [shape = 's32[1]{0}', space=sflag, size = 0x4, scoped, tag = 'scoped memory for tpu_custom_call.1']
    %10 = vsyncpa [#allocation3], 0
    // Predicated region
    $region2: #{tpu_custom_call.1} parent=1 // pred_check
      _
    $region3: #{tpu_custom_call.1} parent=1 // pred_check_branch
      %12 = sbr.rel (0) target = $region5
    $region4: #{tpu_custom_call.1} parent=1 // pred_region
      _
    $region5: #{tpu_custom_call.1} parent=1 // pred_fallthru
      _
    // Predicated region
    $region6: #{tpu_custom_call.1} parent=1 // pred_check
      _
    $region7: #{tpu_custom_call.1} parent=1 // pred_check_branch
      %14 = sbr.rel (0) target = $region9
    $region8: #{tpu_custom_call.1} parent=1 // pred_region
      _
    $region9: #{tpu_custom_call.1} parent=1 // pred_fallthru
      _
    // Predicated region
    $region10: #{tpu_custom_call.1} parent=1 // pred_check
      _
    $region11: #{tpu_custom_call.1} parent=1 // pred_check_branch
      %16 = sbr.rel (0) target = $region13
    $region12: #{tpu_custom_call.1} parent=1 // pred_region
      _
    $region13: #{tpu_custom_call.1} parent=1 // pred_fallthru
      _
    // Predicated region
    $region14: #{tpu_custom_call.1} parent=1 // pred_check
      _
    $region15: #{tpu_custom_call.1} parent=1 // pred_check_branch
      %18 = sbr.rel (0) target = $region17
    $region16: #{tpu_custom_call.1} parent=1 // pred_region
      _
    $region17: #{tpu_custom_call.1} parent=1 // pred_fallthru
      _
    // Predicated region
    $region18: #{tpu_custom_call.1} parent=1 // pred_check
      _
    $region19: #{tpu_custom_call.1} parent=1 // pred_check_branch
      %20 = sbr.rel (0) target = $region21
    $region20: #{tpu_custom_call.1} parent=1 // pred_region
      _
    $region21: #{tpu_custom_call.1} parent=1 // pred_fallthru
      _
    %v22 = vld [vmem:[%s0] sm:$0xff]
    %v23 = vld [vmem:[%s0 + $0x8] sm:$0xff]
    %v24 = vpack.c.bf16 %v23, %v22
    %v25 = vld [vmem:[%s1] sm:$0xf]
    %v26 = vld [vmem:[%s1 + $0x4] sm:$0xf]
    %v27 = vld [vmem:[%s1 + $0x8] sm:$0xf]
    %v28 = vld [vmem:[%s1 + $0xc] sm:$0xf]
    %v29 = vld [vmem:[%s2] sm:$0x1]
    %v31 = vlaneseq
    %v32 = vshrl.u32 %v31, 7
    %v33 = vsub.s32 0, %v32
    %v34 = vrot.slane %v29, %v33
    %v40 = vunpack.c.l.b16 %v25
    %v41 = vunpack.c.l.b16 %v26
    %v42 = vunpack.c.l.b16 %v27
    %v43 = vunpack.c.l.b16 %v28
    %v44 = vpack.c.b16 %v41, %v40
    %v45 = vpack.c.b16 %v43, %v42
    %vm48 = vcmask 261120
    %v50 = vsel %vm48, %v24, 0
    %52 = vmatprep.subr.bf16.mxu0 0
    %53 = vmatpush1.bf16.msra.mxu0 0
    %54 = vmatprep.subr.bf16.mxu0 0
    %55 = vmatpush1.bf16.msra.mxu0 0
    %56 = vmatprep.subr.bf16.mxu0 0
    %57 = vmatpush1.bf16.msra.mxu0 0
    %58 = vmatprep.subr.bf16.mxu0 0
    %59 = vmatpush1.bf16.msra.mxu0 0
    %60 = vmatprep.subr.bf16.mxu0 0
    %61 = vmatpush1.bf16.msra.mxu0 0
    %62 = vmatprep.subr.bf16.mxu0 0
    %63 = vmatpush1.bf16.msra.mxu0 0
    %64 = vmatprep.subr.bf16.mxu0 0
    %65 = vmatpush1.bf16.msra.mxu0 %v45
    %66 = vmatprep.subr.bf16.mxu0 0
    %67 = vmatpush1.bf16.msra.mxu0 %v44
    %68 = vmatprep.subr.bf16.mxu0 0
    %69 = vmatpush2.bf16.msra.mxu0 0
    %70 = vmatprep.subr.bf16.mxu0 0
    %71 = vmatpush2.bf16.msra.mxu0 0
    %72 = vmatprep.subr.bf16.mxu0 0
    %73 = vmatpush2.bf16.msra.mxu0 0
    %74 = vmatprep.subr.bf16.mxu0 0
    %75 = vmatpush2.bf16.msra.mxu0 0
    %76 = vmatprep.subr.bf16.mxu0 0
    %77 = vmatpush2.bf16.msra.mxu0 0
    %78 = vmatprep.subr.bf16.mxu0 0
    %79 = vmatpush2.bf16.msra.mxu0 0
    %80 = vmatprep.subr.bf16.mxu0 0
    %81 = vmatpush2.bf16.msra.mxu0 0
    %82 = vmatprep.subr.bf16.mxu0 0
    %83 = vmatpush2.bf16.msra.mxu0 0
    %84 = vmatprep.mubr.bf16.mxu0 0
    %85 = vmatmul.mubr.bf16.gmra.mxu0 %v50
    %v86 = vpop.f32.mrf.mxu0
    %v87 = vadd.f32 %v34, %v86
    %v88 = vpop.f32.mrf.mxu0
    %v89 = vpop.f32.mrf.mxu0
    %v90 = vadd.f32 %v34, %v89
    %v91 = vpop.f32.mrf.mxu0
    %92 = vdwg.mxu0
    %vm93 = vcmp.ge.f32.partialorder %v87, 0.0
    %vm94 = vcmp.ge.f32.partialorder %v90, 0.0
    %v95 = vmul.f32 %v87, 0.01
    %v96 = vmul.f32 %v90, 0.01
    %v97 = vsel %vm93, %v87, %v95
    %v98 = vsel %vm94, %v90, %v96
    %v99 = vpack.c.bf16 %v98, %v97
    %v100 = vld [vmem:[%s3] sm:$0xf]
    %v101 = vld [vmem:[%s3 + $0x4] sm:$0xf]
    %v102 = vld [vmem:[%s3 + $0x8] sm:$0xf]
    %v103 = vld [vmem:[%s3 + $0xc] sm:$0xf]
    %v104 = vld [vmem:[%s3 + $0x10] sm:$0xf]
    %v105 = vld [vmem:[%s3 + $0x14] sm:$0xf]
    %v106 = vld [vmem:[%s3 + $0x18] sm:$0xf]
    %v107 = vld [vmem:[%s3 + $0x1c] sm:$0xf]
    %v108 = vld [vmem:[%s3 + $0x20] sm:$0xf]
    %v109 = vld [vmem:[%s3 + $0x24] sm:$0xf]
    %v110 = vld [vmem:[%s3 + $0x28] sm:$0xf]
    %v111 = vld [vmem:[%s3 + $0x2c] sm:$0xf]
    %v112 = vld [vmem:[%s3 + $0x30] sm:$0xf]
    %v113 = vld [vmem:[%s3 + $0x34] sm:$0xf]
    %v114 = vld [vmem:[%s3 + $0x38] sm:$0xf]
    %v115 = vld [vmem:[%s3 + $0x3c] sm:$0xf]
    %v116 = vld [vmem:[%s4] sm:$0x1]
    %v118 = vlaneseq
    %v119 = vshrl.u32 %v118, 7
    %v120 = vsub.s32 0, %v119
    %v121 = vrot.slane %v116, %v120
    %v139 = vunpack.c.l.b16 %v100
    %v140 = vunpack.c.l.b16 %v101
    %v141 = vunpack.c.l.b16 %v102
    %v142 = vunpack.c.l.b16 %v103
    %v143 = vunpack.c.l.b16 %v104
    %v144 = vunpack.c.l.b16 %v105
    %v145 = vunpack.c.l.b16 %v106
    %v146 = vunpack.c.l.b16 %v107
    %v147 = vunpack.c.l.b16 %v108
    %v148 = vunpack.c.l.b16 %v109
    %v149 = vunpack.c.l.b16 %v110
    %v150 = vunpack.c.l.b16 %v111
    %v151 = vunpack.c.l.b16 %v112
    %v152 = vunpack.c.l.b16 %v113
    %v153 = vunpack.c.l.b16 %v114
    %v154 = vunpack.c.l.b16 %v115
    %v155 = vpack.c.b16 %v140, %v139
    %v156 = vpack.c.b16 %v142, %v141
    %v157 = vpack.c.b16 %v144, %v143
    %v158 = vpack.c.b16 %v146, %v145
    %v159 = vpack.c.b16 %v148, %v147
    %v160 = vpack.c.b16 %v150, %v149
    %v161 = vpack.c.b16 %v152, %v151
    %v162 = vpack.c.b16 %v154, %v153
    %171 = vmatprep.subr.bf16.mxu0 0
    %172 = vmatpush1.bf16.msra.mxu0 %v162
    %173 = vmatprep.subr.bf16.mxu0 0
    %174 = vmatpush1.bf16.msra.mxu0 %v161
    %175 = vmatprep.subr.bf16.mxu0 0
    %176 = vmatpush1.bf16.msra.mxu0 %v160
    %177 = vmatprep.subr.bf16.mxu0 0
    %178 = vmatpush1.bf16.msra.mxu0 %v159
    %179 = vmatprep.subr.bf16.mxu0 0
    %180 = vmatpush1.bf16.msra.mxu0 %v158
    %181 = vmatprep.subr.bf16.mxu0 0
    %182 = vmatpush1.bf16.msra.mxu0 %v157
    %183 = vmatprep.subr.bf16.mxu0 0
    %184 = vmatpush1.bf16.msra.mxu0 %v156
    %185 = vmatprep.subr.bf16.mxu0 0
    %186 = vmatpush1.bf16.msra.mxu0 %v155
    %187 = vmatprep.subr.bf16.mxu0 0
    %188 = vmatpush2.bf16.msra.mxu0 0
    %189 = vmatprep.subr.bf16.mxu0 0
    %190 = vmatpush2.bf16.msra.mxu0 0
    %191 = vmatprep.subr.bf16.mxu0 0
    %192 = vmatpush2.bf16.msra.mxu0 0
    %193 = vmatprep.subr.bf16.mxu0 0
    %194 = vmatpush2.bf16.msra.mxu0 0
    %195 = vmatprep.subr.bf16.mxu0 0
    %196 = vmatpush2.bf16.msra.mxu0 0
    %197 = vmatprep.subr.bf16.mxu0 0
    %198 = vmatpush2.bf16.msra.mxu0 0
    %199 = vmatprep.subr.bf16.mxu0 0
    %200 = vmatpush2.bf16.msra.mxu0 0
    %201 = vmatprep.subr.bf16.mxu0 0
    %202 = vmatpush2.bf16.msra.mxu0 0
    %203 = vmatprep.mubr.bf16.mxu0 0
    %204 = vmatmul.mubr.bf16.gmra.mxu0 %v99
    %v205 = vpop.f32.mrf.mxu0
    %v206 = vadd.f32 %v121, %v205
    %v207 = vpop.f32.mrf.mxu0
    %v208 = vpop.f32.mrf.mxu0
    %v209 = vadd.f32 %v121, %v208
    %v210 = vpop.f32.mrf.mxu0
    %211 = vdwg.mxu0
    %212 = vst.msk [vmem:[#allocation2] sm:$0xff] %vm48, %v206
    %213 = vst.msk [vmem:[#allocation2 + $0x8] sm:$0xff] %vm48, %v209
    // Predicated region
    $region22: #{tpu_custom_call.1} parent=1 // pred_check
      _
    $region23: #{tpu_custom_call.1} parent=1 // pred_check_branch
      %215 = sbr.rel (0) target = $region25
    $region24: #{tpu_custom_call.1} parent=1 // pred_region
      %s217 = ssub.s32 256, 256
      %218 = vsyncadd [#allocation3], %s217
      %s219 = sshll.u32 [#allocation2], 4
      %s220 = int_to_ptr.vmem [resolvable:$true] %s219
      %225 = dma.vmem_to_hbm [thread:$0]  %s220, 256, %s5, [#allocation3], 128, 128, 8
    $region25: #{tpu_custom_call.1} parent=1 // pred_fallthru
      _
    // Predicated region
    $region26: #{tpu_custom_call.1} parent=1 // pred_check
      _
    $region27: #{tpu_custom_call.1} parent=1 // pred_check_branch
      %227 = sbr.rel (0) target = $region29
    $region28: #{tpu_custom_call.1} parent=1 // pred_region
      %228 = dma.done [#allocation3], 256
    $region29: #{tpu_custom_call.1} parent=1 // pred_fallthru
      _
    %229 = vsyncpa [#allocation3], 1

</llo_original>
